<compile_context>
chip_gen: v7x
topology: tpu7x:2x2x1
jax: 0.10.0
libtpu: 0.0.40
codegen_flags: <defaults>
</compile_context>

<pallas_src>
import jax
import jax.numpy as jnp
from jax import lax
from jax.experimental import pallas as pl
from jax.experimental.pallas import tpu as pltpu


def _round_up(a, m):
    return -(-a // m) * m


def length_policy_kernel(x_ref, w0_ref, b0_ref, wh_ref, bh_ref,
                         wp_ref, bp_ref, wo_ref, bo_ref, g_ref, out_ref):
    # layer 0: (TB, D) @ (D, H) -> (TB, H); bf16 MXU, f32 accumulate
    h = jnp.dot(x_ref[...], w0_ref[...], preferred_element_type=jnp.float32)
    h = jnp.maximum(h + b0_ref[...], 0.0)

    # remaining hidden layers (stacked weights), fully unrolled
    def body(i, h):
        y = jnp.dot(h.astype(jnp.bfloat16), wh_ref[i],
                    preferred_element_type=jnp.float32)
        return jnp.maximum(y + bh_ref[i], 0.0)

    h = lax.fori_loop(0, wh_ref.shape[0], body, h, unroll=True)

    # preout: (TB, H) @ (H, 32) -> (TB, 32), ReLU
    z = jnp.dot(h.astype(jnp.bfloat16), wp_ref[...],
                preferred_element_type=jnp.float32)
    z = jnp.maximum(z + bp_ref[...], 0.0)

    # out: (TB, 32) @ (32, L_pad); padded classes carry a -1e30 bias
    logits = jnp.dot(z.astype(jnp.bfloat16), wo_ref[...],
                     preferred_element_type=jnp.float32) + bo_ref[...]

    # stable log_softmax over the (padded) class axis
    m = jnp.max(logits, axis=-1, keepdims=True)
    shifted = logits - m
    lse = jnp.log(jnp.sum(jnp.exp(shifted), axis=-1, keepdims=True))
    logp = shifted - lse

    # fused Categorical sample via Gumbel-max; noise streamed from the wrapper
    # (padded lanes have logits ~ -1e30 so they can never win the argmax)
    pert = logits + g_ref[...]
    mx = jnp.max(pert, axis=-1, keepdims=True)
    lane = lax.broadcasted_iota(jnp.int32, pert.shape, 1)
    cand = jnp.where(pert >= mx, lane, jnp.int32(pert.shape[-1]))
    samp = jnp.min(cand, axis=-1, keepdims=True).astype(jnp.float32)

    # stash the (exactly representable) sample index in the last padded lane:
    # one lane-dense output slab, no masked 1-lane store / extra DMA stream
    last = jnp.int32(pert.shape[-1] - 1)
    out_ref[...] = jnp.where(lane == last, samp, logp)


def length_policy_forward(x, params, sample_key):
    """Returns (length_prior [B, L] log-probs, samples [B] int32)."""
    w0, b0, wh, bh, wp, bp, wo, bo = params
    B, input_dim = x.shape
    H = w0.shape[1]
    P = wp.shape[1]
    L = wo.shape[1]
    n_rest = wh.shape[0]

    # lane-dense class axis with at least one spare lane for the sample stash
    L_pad = max(128, _round_up(L + 1, 128))

    # batch tiling: multiples of 16 (bf16 sublane packing); when the padded
    # batch allows it, guarantee >= 2 grid steps so v7x can use both cores
    B16 = _round_up(max(B, 16), 16)
    if B16 <= 16:
        TB = B16
    else:
        TB = min(1024, _round_up(_round_up(B16, 32) // 2, 16))
    B_pad = _round_up(B16, TB)

    # bf16 activations in the wrapper (kernel would truncate anyway)
    x_pad = jnp.zeros((B_pad, input_dim), jnp.bfloat16).at[:B].set(
        x.astype(jnp.bfloat16))

    # pad wo/bo to L_pad columns; padded classes get a -1e30 bias
    wo_pad = jnp.zeros((P, L_pad), wo.dtype).at[:, :L].set(wo)
    bo_pad = jnp.full((1, L_pad), -1e30, jnp.float32).at[:, :L].set(bo)

    # bf16 weights (half the weight DMA, MXU-native); biases stay f32
    w0b = w0.astype(jnp.bfloat16)
    whb = wh.astype(jnp.bfloat16)
    wpb = wp.astype(jnp.bfloat16)
    wob = wo_pad.astype(jnp.bfloat16)

    # wrapper-side Gumbel noise for the fused Categorical (Gumbel-max) sample
    gumbel = jax.random.gumbel(sample_key, (B_pad, L_pad), jnp.float32)

    flops = 2 * B_pad * (input_dim * H + n_rest * H * H + H * P + P * L_pad)
    w_bytes = 2 * (w0b.size + whb.size + wpb.size + wob.size)
    b_bytes = 4 * (b0.size + bh.size + bp.size + bo_pad.size)
    bytes_accessed = (w_bytes + b_bytes + 2 * x_pad.size
                      + 4 * gumbel.size + 4 * B_pad * L_pad)

    # scoped-VMEM budget derived from the actual per-step footprint
    tile_io = 2 * TB * input_dim + 2 * 4 * TB * L_pad      # x + gumbel + out
    vmem_est = (2 * (w_bytes + b_bytes) + 2 * tile_io
                + 8 * TB * (H + L_pad) * 4 + (2 << 20))
    vmem_limit = int(min(64 << 20, max(16 << 20, vmem_est)))

    rep = lambda nd: (lambda i: (0,) * nd)  # weight blocks stay VMEM-resident

    out = pl.pallas_call(
        length_policy_kernel,
        out_shape=jax.ShapeDtypeStruct((B_pad, L_pad), jnp.float32),
        grid_spec=pltpu.PrefetchScalarGridSpec(
            num_scalar_prefetch=0,
            grid=(B_pad // TB,),
            in_specs=[
                pl.BlockSpec((TB, input_dim), lambda i: (i, 0)),
                pl.BlockSpec(w0b.shape, rep(2)),
                pl.BlockSpec(b0.shape, rep(2)),
                pl.BlockSpec(whb.shape, rep(3)),
                pl.BlockSpec(bh.shape, rep(3)),
                pl.BlockSpec(wpb.shape, rep(2)),
                pl.BlockSpec(bp.shape, rep(2)),
                pl.BlockSpec(wob.shape, rep(2)),
                pl.BlockSpec(bo_pad.shape, rep(2)),
                pl.BlockSpec((TB, L_pad), lambda i: (i, 0)),
            ],
            out_specs=pl.BlockSpec((TB, L_pad), lambda i: (i, 0)),
        ),
        compiler_params=pltpu.CompilerParams(
            dimension_semantics=("parallel",),
            vmem_limit_bytes=vmem_limit),
        cost_estimate=pl.CostEstimate(
            flops=flops,
            transcendentals=B_pad * L_pad + B_pad,
            bytes_accessed=bytes_accessed),
    )(x_pad, w0b, b0, whb, bh, wpb, bp, wob, bo_pad, gumbel)

    length_prior = out[:B, :L]
    samples = out[:B, L_pad - 1].astype(jnp.int32)   # exact: indices < 128
    return length_prior, samples


def init_params(key, input_dim, lengths, hidden=128, n_layers=6):
    """Deterministic synthetic init (Glorot-ish normal), weights as (in, out)."""
    ks = jax.random.split(key, 2 * (n_layers + 2))

    def lin(k, fan_in, fan_out):
        scale = 1.0 / jnp.sqrt(jnp.float32(fan_in))
        return jax.random.normal(k, (fan_in, fan_out), jnp.float32) * scale

    w0 = lin(ks[0], input_dim, hidden)
    b0 = jax.random.normal(ks[1], (1, hidden), jnp.float32) * 0.01

    wh_list, bh_list = [], []
    for i in range(n_layers - 1):
        wh_list.append(lin(ks[2 + 2 * i], hidden, hidden))
        bh_list.append(jax.random.normal(ks[3 + 2 * i], (1, hidden),
                                         jnp.float32) * 0.01)
    wh = jnp.stack(wh_list, axis=0)            # (5, hidden, hidden)
    bh = jnp.stack(bh_list, axis=0)            # (5, 1, hidden)

    wp = lin(ks[2 * n_layers], hidden, 32)
    bp = jax.random.normal(ks[2 * n_layers + 1], (1, 32), jnp.float32) * 0.01

    wo = lin(ks[2 * n_layers + 2], 32, lengths)
    bo = jax.random.normal(ks[2 * n_layers + 3], (1, lengths),
                           jnp.float32) * 0.01

    return (w0, b0, wh, bh, wp, bp, wo, bo)


def reference_logprior(x, params):
    """Pure-JAX reference with the same bf16 weights/activations, f32 accum."""
    w0, b0, wh, bh, wp, bp, wo, bo = params
    bf = jnp.bfloat16
    h = jnp.maximum(jnp.dot(x.astype(bf), w0.astype(bf),
                            preferred_element_type=jnp.float32) + b0, 0.0)
    for i in range(wh.shape[0]):
        h = jnp.maximum(jnp.dot(h.astype(bf), wh[i].astype(bf),
                                preferred_element_type=jnp.float32) + bh[i], 0.0)
    z = jnp.maximum(jnp.dot(h.astype(bf), wp.astype(bf),
                            preferred_element_type=jnp.float32) + bp, 0.0)
    logits = jnp.dot(z.astype(bf), wo.astype(bf),
                     preferred_element_type=jnp.float32) + bo
    return jax.nn.log_softmax(logits, axis=-1)


if __name__ == "__main__":
    key = jax.random.PRNGKey(0)
    k_x, k_params, k_sample = jax.random.split(key, 3)

    B, INPUT_DIM, LENGTHS = 4, 32, 8
    x = jax.random.normal(k_x, (B, INPUT_DIM), jnp.float32)
    params = init_params(k_params, INPUT_DIM, LENGTHS)

    length_prior, samples = length_policy_forward(x, params, k_sample)
    jax.block_until_ready((length_prior, samples))

    # sanity: shapes, rows sum to 1 in prob space, samples in range
    assert length_prior.shape == (B, LENGTHS)
    assert samples.shape == (B,)
    row_sums = jnp.sum(jnp.exp(length_prior), axis=-1)
    assert bool(jnp.all(jnp.abs(row_sums - 1.0) < 1e-4))
    assert bool(jnp.all((samples >= 0) & (samples < LENGTHS)))

    # match the pure-JAX reference (same bf16 weights/activations, f32 accum)
    ref = reference_logprior(x, params)
    assert bool(jnp.all(jnp.abs(length_prior - ref) < 2e-2))

    # NOTE: samples are drawn via Gumbel-max with jax.random noise, so exact
    # values differ from torch's Categorical RNG stream by design.
    print("KERNEL_OK")
</pallas_src>

<mosaic_0001>
module attributes {stable_mosaic.version = 11 : i64} {
  func.func @length_policy_kernel(%arg0: i32, %arg1: memref<16x32xbf16, #tpu.memory_space<vmem>>, %arg2: memref<32x128xbf16, #tpu.memory_space<vmem>>, %arg3: memref<1x128xf32, #tpu.memory_space<vmem>>, %arg4: memref<5x128x128xbf16, #tpu.memory_space<vmem>>, %arg5: memref<5x1x128xf32, #tpu.memory_space<vmem>>, %arg6: memref<128x32xbf16, #tpu.memory_space<vmem>>, %arg7: memref<1x32xf32, #tpu.memory_space<vmem>>, %arg8: memref<32x128xbf16, #tpu.memory_space<vmem>>, %arg9: memref<1x128xf32, #tpu.memory_space<vmem>>, %arg10: memref<16x128xf32, #tpu.memory_space<vmem>>, %arg11: memref<16x128xf32, #tpu.memory_space<vmem>>) attributes {dimension_semantics = [#tpu.dimension_semantics<parallel>], iteration_bounds = array<i64: 1>, scalar_prefetch = 0 : i64, scratch_operands = 0 : i64, tpu.core_type = #tpu.core_type<tc>, window_params = [{transform_indices = @transform_0, window_bounds = array<i64: 16, 32>}, {pipeline_mode = #tpu.pipeline_mode<synchronous>, transform_indices = @transform_1, window_bounds = array<i64: 32, 128>}, {pipeline_mode = #tpu.pipeline_mode<synchronous>, transform_indices = @transform_2, window_bounds = array<i64: 1, 128>}, {pipeline_mode = #tpu.pipeline_mode<synchronous>, transform_indices = @transform_3, window_bounds = array<i64: 5, 128, 128>}, {pipeline_mode = #tpu.pipeline_mode<synchronous>, transform_indices = @transform_4, window_bounds = array<i64: 5, 1, 128>}, {pipeline_mode = #tpu.pipeline_mode<synchronous>, transform_indices = @transform_5, window_bounds = array<i64: 128, 32>}, {pipeline_mode = #tpu.pipeline_mode<synchronous>, transform_indices = @transform_6, window_bounds = array<i64: 1, 32>}, {pipeline_mode = #tpu.pipeline_mode<synchronous>, transform_indices = @transform_7, window_bounds = array<i64: 32, 128>}, {pipeline_mode = #tpu.pipeline_mode<synchronous>, transform_indices = @transform_8, window_bounds = array<i64: 1, 128>}, {transform_indices = @transform_9, window_bounds = array<i64: 16, 128>}, {transform_indices = @transform_10, window_bounds = array<i64: 16, 128>}]} {
    %c0 = arith.constant 0 : index
    %c0_0 = arith.constant 0 : index
    %0 = vector.load %arg1[%c0, %c0_0] : memref<16x32xbf16, #tpu.memory_space<vmem>>, vector<16x32xbf16>
    %c0_1 = arith.constant 0 : index
    %c0_2 = arith.constant 0 : index
    %1 = vector.load %arg2[%c0_1, %c0_2] : memref<32x128xbf16, #tpu.memory_space<vmem>>, vector<32x128xbf16>
    %cst = arith.constant dense<0.000000e+00> : vector<16x128xf32>
    %2 = tpu.matmul %0, %1, %cst {dimension_numbers = #tpu.dot_dimension_numbers<[1], [0], [0], [1], [0, 0, 1, 1], [], []>} : vector<16x32xbf16>, vector<32x128xbf16>, vector<16x128xf32> -> vector<16x128xf32>
    %c0_3 = arith.constant 0 : index
    %c0_4 = arith.constant 0 : index
    %3 = vector.load %arg3[%c0_3, %c0_4] : memref<1x128xf32, #tpu.memory_space<vmem>>, vector<1x128xf32>
    %4 = vector.broadcast %3 : vector<1x128xf32> to vector<16x128xf32>
    %5 = arith.addf %2, %4 : vector<16x128xf32>
    %cst_5 = arith.constant 0.000000e+00 : f32
    %6 = vector.broadcast %cst_5 : f32 to vector<16x128xf32>
    %7 = arith.maximumf %5, %6 : vector<16x128xf32>
    %c0_i32 = arith.constant 0 : i32
    %8 = arith.truncf %7 : vector<16x128xf32> to vector<16x128xbf16>
    %9 = arith.index_cast %c0_i32 : i32 to index
    %c0_6 = arith.constant 0 : index
    %c0_7 = arith.constant 0 : index
    %10 = vector.load %arg4[%9, %c0_6, %c0_7] : memref<5x128x128xbf16, #tpu.memory_space<vmem>>, vector<1x128x128xbf16>
    %11 = vector.shape_cast %10 : vector<1x128x128xbf16> to vector<128x128xbf16>
    %cst_8 = arith.constant dense<0.000000e+00> : vector<16x128xf32>
    %12 = tpu.matmul %8, %11, %cst_8 {dimension_numbers = #tpu.dot_dimension_numbers<[1], [0], [0], [1], [0, 0, 1, 1], [], []>} : vector<16x128xbf16>, vector<128x128xbf16>, vector<16x128xf32> -> vector<16x128xf32>
    %13 = arith.index_cast %c0_i32 : i32 to index
    %c0_9 = arith.constant 0 : index
    %c0_10 = arith.constant 0 : index
    %14 = vector.load %arg5[%13, %c0_9, %c0_10] : memref<5x1x128xf32, #tpu.memory_space<vmem>>, vector<1x1x128xf32>
    %15 = vector.shape_cast %14 : vector<1x1x128xf32> to vector<1x128xf32>
    %16 = vector.broadcast %15 : vector<1x128xf32> to vector<16x128xf32>
    %17 = arith.addf %12, %16 : vector<16x128xf32>
    %cst_11 = arith.constant 0.000000e+00 : f32
    %18 = vector.broadcast %cst_11 : f32 to vector<16x128xf32>
    %19 = arith.maximumf %17, %18 : vector<16x128xf32>
    %c1_i32 = arith.constant 1 : i32
    %20 = arith.truncf %19 : vector<16x128xf32> to vector<16x128xbf16>
    %21 = arith.index_cast %c1_i32 : i32 to index
    %c0_12 = arith.constant 0 : index
    %c0_13 = arith.constant 0 : index
    %22 = vector.load %arg4[%21, %c0_12, %c0_13] : memref<5x128x128xbf16, #tpu.memory_space<vmem>>, vector<1x128x128xbf16>
    %23 = vector.shape_cast %22 : vector<1x128x128xbf16> to vector<128x128xbf16>
    %cst_14 = arith.constant dense<0.000000e+00> : vector<16x128xf32>
    %24 = tpu.matmul %20, %23, %cst_14 {dimension_numbers = #tpu.dot_dimension_numbers<[1], [0], [0], [1], [0, 0, 1, 1], [], []>} : vector<16x128xbf16>, vector<128x128xbf16>, vector<16x128xf32> -> vector<16x128xf32>
    %25 = arith.index_cast %c1_i32 : i32 to index
    %c0_15 = arith.constant 0 : index
    %c0_16 = arith.constant 0 : index
    %26 = vector.load %arg5[%25, %c0_15, %c0_16] : memref<5x1x128xf32, #tpu.memory_space<vmem>>, vector<1x1x128xf32>
    %27 = vector.shape_cast %26 : vector<1x1x128xf32> to vector<1x128xf32>
    %28 = vector.broadcast %27 : vector<1x128xf32> to vector<16x128xf32>
    %29 = arith.addf %24, %28 : vector<16x128xf32>
    %cst_17 = arith.constant 0.000000e+00 : f32
    %30 = vector.broadcast %cst_17 : f32 to vector<16x128xf32>
    %31 = arith.maximumf %29, %30 : vector<16x128xf32>
    %c2_i32 = arith.constant 2 : i32
    %32 = arith.truncf %31 : vector<16x128xf32> to vector<16x128xbf16>
    %33 = arith.index_cast %c2_i32 : i32 to index
    %c0_18 = arith.constant 0 : index
    %c0_19 = arith.constant 0 : index
    %34 = vector.load %arg4[%33, %c0_18, %c0_19] : memref<5x128x128xbf16, #tpu.memory_space<vmem>>, vector<1x128x128xbf16>
    %35 = vector.shape_cast %34 : vector<1x128x128xbf16> to vector<128x128xbf16>
    %cst_20 = arith.constant dense<0.000000e+00> : vector<16x128xf32>
    %36 = tpu.matmul %32, %35, %cst_20 {dimension_numbers = #tpu.dot_dimension_numbers<[1], [0], [0], [1], [0, 0, 1, 1], [], []>} : vector<16x128xbf16>, vector<128x128xbf16>, vector<16x128xf32> -> vector<16x128xf32>
    %37 = arith.index_cast %c2_i32 : i32 to index
    %c0_21 = arith.constant 0 : index
    %c0_22 = arith.constant 0 : index
    %38 = vector.load %arg5[%37, %c0_21, %c0_22] : memref<5x1x128xf32, #tpu.memory_space<vmem>>, vector<1x1x128xf32>
    %39 = vector.shape_cast %38 : vector<1x1x128xf32> to vector<1x128xf32>
    %40 = vector.broadcast %39 : vector<1x128xf32> to vector<16x128xf32>
    %41 = arith.addf %36, %40 : vector<16x128xf32>
    %cst_23 = arith.constant 0.000000e+00 : f32
    %42 = vector.broadcast %cst_23 : f32 to vector<16x128xf32>
    %43 = arith.maximumf %41, %42 : vector<16x128xf32>
    %c3_i32 = arith.constant 3 : i32
    %44 = arith.truncf %43 : vector<16x128xf32> to vector<16x128xbf16>
    %45 = arith.index_cast %c3_i32 : i32 to index
    %c0_24 = arith.constant 0 : index
    %c0_25 = arith.constant 0 : index
    %46 = vector.load %arg4[%45, %c0_24, %c0_25] : memref<5x128x128xbf16, #tpu.memory_space<vmem>>, vector<1x128x128xbf16>
    %47 = vector.shape_cast %46 : vector<1x128x128xbf16> to vector<128x128xbf16>
    %cst_26 = arith.constant dense<0.000000e+00> : vector<16x128xf32>
    %48 = tpu.matmul %44, %47, %cst_26 {dimension_numbers = #tpu.dot_dimension_numbers<[1], [0], [0], [1], [0, 0, 1, 1], [], []>} : vector<16x128xbf16>, vector<128x128xbf16>, vector<16x128xf32> -> vector<16x128xf32>
    %49 = arith.index_cast %c3_i32 : i32 to index
    %c0_27 = arith.constant 0 : index
    %c0_28 = arith.constant 0 : index
    %50 = vector.load %arg5[%49, %c0_27, %c0_28] : memref<5x1x128xf32, #tpu.memory_space<vmem>>, vector<1x1x128xf32>
    %51 = vector.shape_cast %50 : vector<1x1x128xf32> to vector<1x128xf32>
    %52 = vector.broadcast %51 : vector<1x128xf32> to vector<16x128xf32>
    %53 = arith.addf %48, %52 : vector<16x128xf32>
    %cst_29 = arith.constant 0.000000e+00 : f32
    %54 = vector.broadcast %cst_29 : f32 to vector<16x128xf32>
    %55 = arith.maximumf %53, %54 : vector<16x128xf32>
    %c4_i32 = arith.constant 4 : i32
    %56 = arith.truncf %55 : vector<16x128xf32> to vector<16x128xbf16>
    %57 = arith.index_cast %c4_i32 : i32 to index
    %c0_30 = arith.constant 0 : index
    %c0_31 = arith.constant 0 : index
    %58 = vector.load %arg4[%57, %c0_30, %c0_31] : memref<5x128x128xbf16, #tpu.memory_space<vmem>>, vector<1x128x128xbf16>
    %59 = vector.shape_cast %58 : vector<1x128x128xbf16> to vector<128x128xbf16>
    %cst_32 = arith.constant dense<0.000000e+00> : vector<16x128xf32>
    %60 = tpu.matmul %56, %59, %cst_32 {dimension_numbers = #tpu.dot_dimension_numbers<[1], [0], [0], [1], [0, 0, 1, 1], [], []>} : vector<16x128xbf16>, vector<128x128xbf16>, vector<16x128xf32> -> vector<16x128xf32>
    %61 = arith.index_cast %c4_i32 : i32 to index
    %c0_33 = arith.constant 0 : index
    %c0_34 = arith.constant 0 : index
    %62 = vector.load %arg5[%61, %c0_33, %c0_34] : memref<5x1x128xf32, #tpu.memory_space<vmem>>, vector<1x1x128xf32>
    %63 = vector.shape_cast %62 : vector<1x1x128xf32> to vector<1x128xf32>
    %64 = vector.broadcast %63 : vector<1x128xf32> to vector<16x128xf32>
    %65 = arith.addf %60, %64 : vector<16x128xf32>
    %cst_35 = arith.constant 0.000000e+00 : f32
    %66 = vector.broadcast %cst_35 : f32 to vector<16x128xf32>
    %67 = arith.maximumf %65, %66 : vector<16x128xf32>
    %c5_i32 = arith.constant 5 : i32
    %68 = arith.truncf %67 : vector<16x128xf32> to vector<16x128xbf16>
    %c0_36 = arith.constant 0 : index
    %c0_37 = arith.constant 0 : index
    %69 = vector.load %arg6[%c0_36, %c0_37] : memref<128x32xbf16, #tpu.memory_space<vmem>>, vector<128x32xbf16>
    %cst_38 = arith.constant dense<0.000000e+00> : vector<16x32xf32>
    %70 = tpu.matmul %68, %69, %cst_38 {dimension_numbers = #tpu.dot_dimension_numbers<[1], [0], [0], [1], [0, 0, 1, 1], [], []>} : vector<16x128xbf16>, vector<128x32xbf16>, vector<16x32xf32> -> vector<16x32xf32>
    %c0_39 = arith.constant 0 : index
    %c0_40 = arith.constant 0 : index
    %71 = vector.load %arg7[%c0_39, %c0_40] : memref<1x32xf32, #tpu.memory_space<vmem>>, vector<1x32xf32>
    %72 = vector.broadcast %71 : vector<1x32xf32> to vector<16x32xf32>
    %73 = arith.addf %70, %72 : vector<16x32xf32>
    %cst_41 = arith.constant 0.000000e+00 : f32
    %74 = vector.broadcast %cst_41 : f32 to vector<16x32xf32>
    %75 = arith.maximumf %73, %74 : vector<16x32xf32>
    %76 = arith.truncf %75 : vector<16x32xf32> to vector<16x32xbf16>
    %c0_42 = arith.constant 0 : index
    %c0_43 = arith.constant 0 : index
    %77 = vector.load %arg8[%c0_42, %c0_43] : memref<32x128xbf16, #tpu.memory_space<vmem>>, vector<32x128xbf16>
    %cst_44 = arith.constant dense<0.000000e+00> : vector<16x128xf32>
    %78 = tpu.matmul %76, %77, %cst_44 {dimension_numbers = #tpu.dot_dimension_numbers<[1], [0], [0], [1], [0, 0, 1, 1], [], []>} : vector<16x32xbf16>, vector<32x128xbf16>, vector<16x128xf32> -> vector<16x128xf32>
    %c0_45 = arith.constant 0 : index
    %c0_46 = arith.constant 0 : index
    %79 = vector.load %arg9[%c0_45, %c0_46] : memref<1x128xf32, #tpu.memory_space<vmem>>, vector<1x128xf32>
    %80 = vector.broadcast %79 : vector<1x128xf32> to vector<16x128xf32>
    %81 = arith.addf %78, %80 : vector<16x128xf32>
    %cst_47 = arith.constant dense<0xFF800000> : vector<16xf32>
    %82 = vector.multi_reduction <maximumf>, %81, %cst_47 [1] : vector<16x128xf32> to vector<16xf32>
    %83 = vector.shape_cast %82 : vector<16xf32> to vector<16x1xf32>
    %84 = vector.broadcast %83 : vector<16x1xf32> to vector<16x128xf32>
    %85 = arith.subf %81, %84 : vector<16x128xf32>
    %86 = math.exp %85 : vector<16x128xf32>
    %cst_48 = arith.constant dense<0.000000e+00> : vector<16xf32>
    %87 = vector.multi_reduction <add>, %86, %cst_48 [1] : vector<16x128xf32> to vector<16xf32>
    %88 = vector.shape_cast %87 : vector<16xf32> to vector<16x1xf32>
    %89 = math.log %88 : vector<16x1xf32>
    %90 = vector.broadcast %89 : vector<16x1xf32> to vector<16x128xf32>
    %91 = arith.subf %85, %90 : vector<16x128xf32>
    %c0_49 = arith.constant 0 : index
    %c0_50 = arith.constant 0 : index
    %92 = vector.load %arg10[%c0_49, %c0_50] : memref<16x128xf32, #tpu.memory_space<vmem>>, vector<16x128xf32>
    %93 = arith.addf %81, %92 : vector<16x128xf32>
    %cst_51 = arith.constant dense<0xFF800000> : vector<16xf32>
    %94 = vector.multi_reduction <maximumf>, %93, %cst_51 [1] : vector<16x128xf32> to vector<16xf32>
    %95 = vector.shape_cast %94 : vector<16xf32> to vector<16x1xf32>
    %96 = tpu.iota {dimensions = array<i32: 1>} : vector<16x128xi32>
    %97 = vector.broadcast %95 : vector<16x1xf32> to vector<16x128xf32>
    %98 = arith.cmpf oge, %93, %97 : vector<16x128xf32>
    %c128_i32 = arith.constant 128 : i32
    %99 = vector.broadcast %c128_i32 : i32 to vector<16x128xi32>
    %100 = arith.select %98, %96, %99 : vector<16x128xi1>, vector<16x128xi32>
    %cst_52 = arith.constant dense<2147483647> : vector<16xi32>
    %101 = vector.multi_reduction <minsi>, %100, %cst_52 [1] : vector<16x128xi32> to vector<16xi32>
    %102 = vector.shape_cast %101 : vector<16xi32> to vector<16x1xi32>
    %103 = arith.sitofp %102 : vector<16x1xi32> to vector<16x1xf32>
    %c127_i32 = arith.constant 127 : i32
    %104 = vector.broadcast %c127_i32 : i32 to vector<16x128xi32>
    %105 = arith.cmpi eq, %96, %104 : vector<16x128xi32>
    %106 = vector.shape_cast %103 : vector<16x1xf32> to vector<16x1xf32>
    %107 = vector.broadcast %106 : vector<16x1xf32> to vector<16x128xf32>
    %108 = arith.select %105, %107, %91 : vector<16x128xi1>, vector<16x128xf32>
    %c0_53 = arith.constant 0 : index
    %c0_54 = arith.constant 0 : index
    %109 = vector.load %arg11[%c0_53, %c0_54] : memref<16x128xf32, #tpu.memory_space<vmem>>, vector<16x128xf32>
    tpu.vector_store %arg11[%c0_53, %c0_54], %108 {strides = array<i32>} : memref<16x128xf32, #tpu.memory_space<vmem>>, vector<16x128xf32>,
    return
  }
  func.func @transform_0(%arg0: i32) -> (i32, i32) {
    %c0_i32 = arith.constant 0 : i32
    %c0_i32_0 = arith.constant 0 : i32
    return %arg0, %c0_i32 : i32, i32
  }
  func.func @transform_1(%arg0: i32) -> (i32, i32) {
    %c0_i32 = arith.constant 0 : i32
    %c0_i32_0 = arith.constant 0 : i32
    %c0_i32_1 = arith.constant 0 : i32
    return %c0_i32, %c0_i32_0 : i32, i32
  }
  func.func @transform_2(%arg0: i32) -> (i32, i32) {
    %c0_i32 = arith.constant 0 : i32
    %c0_i32_0 = arith.constant 0 : i32
    %c0_i32_1 = arith.constant 0 : i32
    return %c0_i32, %c0_i32_0 : i32, i32
  }
  func.func @transform_3(%arg0: i32) -> (i32, i32, i32) {
    %c0_i32 = arith.constant 0 : i32
    %c0_i32_0 = arith.constant 0 : i32
    %c0_i32_1 = arith.constant 0 : i32
    %c0_i32_2 = arith.constant 0 : i32
    return %c0_i32, %c0_i32_0, %c0_i32_1 : i32, i32, i32
  }
  func.func @transform_4(%arg0: i32) -> (i32, i32, i32) {
    %c0_i32 = arith.constant 0 : i32
    %c0_i32_0 = arith.constant 0 : i32
    %c0_i32_1 = arith.constant 0 : i32
    %c0_i32_2 = arith.constant 0 : i32
    return %c0_i32, %c0_i32_0, %c0_i32_1 : i32, i32, i32
  }
  func.func @transform_5(%arg0: i32) -> (i32, i32) {
    %c0_i32 = arith.constant 0 : i32
    %c0_i32_0 = arith.constant 0 : i32
    %c0_i32_1 = arith.constant 0 : i32
    return %c0_i32, %c0_i32_0 : i32, i32
  }
  func.func @transform_6(%arg0: i32) -> (i32, i32) {
    %c0_i32 = arith.constant 0 : i32
    %c0_i32_0 = arith.constant 0 : i32
    %c0_i32_1 = arith.constant 0 : i32
    return %c0_i32, %c0_i32_0 : i32, i32
  }
  func.func @transform_7(%arg0: i32) -> (i32, i32) {
    %c0_i32 = arith.constant 0 : i32
    %c0_i32_0 = arith.constant 0 : i32
    %c0_i32_1 = arith.constant 0 : i32
    return %c0_i32, %c0_i32_0 : i32, i32
  }
  func.func @transform_8(%arg0: i32) -> (i32, i32) {
    %c0_i32 = arith.constant 0 : i32
    %c0_i32_0 = arith.constant 0 : i32
    %c0_i32_1 = arith.constant 0 : i32
    return %c0_i32, %c0_i32_0 : i32, i32
  }
  func.func @transform_9(%arg0: i32) -> (i32, i32) {
    %c0_i32 = arith.constant 0 : i32
    %c0_i32_0 = arith.constant 0 : i32
    return %arg0, %c0_i32 : i32, i32
  }
  func.func @transform_10(%arg0: i32) -> (i32, i32) {
    %c0_i32 = arith.constant 0 : i32
    %c0_i32_0 = arith.constant 0 : i32
    return %arg0, %c0_i32 : i32, i32
  }
}

</mosaic_0001>

<llo_original>
// kernel: tpu_custom_call.1
$region0: #{tpu_custom_call.1}
  #allocation0 [shape = 'u32[]', space=smem, size = 0x4, offset = 0x4, fixed_abs, tag = 'smem constant byte address 0x4 - core index']
  #allocation1 [shape = 'u32[144,128]{1,0:T(1,128)}', space=vmem, size = 0x12000, scoped, tag = 'internal scratch']
  %s0 = inlined_call_operand.vmem [shape: bf16[16,32], index: 0, kind: input, shape index: {}]
  %s1 = inlined_call_operand.vmem [shape: bf16[32,128], index: 1, kind: input, shape index: {}]
  %s2 = inlined_call_operand.vmem [shape: f32[1,128], index: 2, kind: input, shape index: {}]
  %s3 = inlined_call_operand.hbm [shape: bf16[5,128,128], index: 3, kind: input, shape index: {}]
  %s4 = inlined_call_operand.vmem [shape: f32[5,1,128], index: 4, kind: input, shape index: {}]
  %s5 = inlined_call_operand.vmem [shape: bf16[128,32], index: 5, kind: input, shape index: {}]
  %s6 = inlined_call_operand.vmem [shape: f32[1,32], index: 6, kind: input, shape index: {}]
  %s7 = inlined_call_operand.vmem [shape: bf16[32,128], index: 7, kind: input, shape index: {}]
  %s8 = inlined_call_operand.vmem [shape: f32[1,128], index: 8, kind: input, shape index: {}]
  %s9 = inlined_call_operand.vmem [shape: f32[16,128], index: 9, kind: input, shape index: {}]
  %s10 = inlined_call_operand.hbm [shape: f32[16,128], index: 10, kind: output, shape index: {}]
  %s11 = sld [smem:[#allocation0]]
  $region54: #{tpu_custom_call.1} parent=0
    _
  %s13 = ssub.s32 1, %s11
  %s14 = scalar_select 0, %s13, %s11
  $region1: #{tpu_custom_call.1} parent=0
    #allocation2 [shape = 'u8[163840]{0}', space=vmem, size = 0x28000, scoped, tag = 'input window, operand 3, single buffered']
    #allocation3 [shape = 's32[1]{0}', space=sflag, size = 0x4, scoped, tag = 'scoped memory for tpu_custom_call.1']
    #allocation4 [shape = 's32[1]{0}', space=sflag, size = 0x4, scoped, tag = 'scoped memory for tpu_custom_call.1']
    #allocation5 [shape = 'u8[8192]{0}', space=vmem, size = 0x2000, scoped, tag = 'output window, operand 0, single buffered']
    %15 = vsyncpa [#allocation3], 0
    %16 = vsyncpa [#allocation4], 0
    // Predicated region
    $region2: #{tpu_custom_call.1} parent=1 // pred_check
      _
    $region3: #{tpu_custom_call.1} parent=1 // pred_check_branch
      %18 = sbr.rel (0) target = $region5
    $region4: #{tpu_custom_call.1} parent=1 // pred_region
      _
    $region5: #{tpu_custom_call.1} parent=1 // pred_fallthru
      _
    // Predicated region
    $region6: #{tpu_custom_call.1} parent=1 // pred_check
      _
    $region7: #{tpu_custom_call.1} parent=1 // pred_check_branch
      %20 = sbr.rel (0) target = $region9
    $region8: #{tpu_custom_call.1} parent=1 // pred_region
      _
    $region9: #{tpu_custom_call.1} parent=1 // pred_fallthru
      _
    // Predicated region
    $region10: #{tpu_custom_call.1} parent=1 // pred_check
      _
    $region11: #{tpu_custom_call.1} parent=1 // pred_check_branch
      %22 = sbr.rel (0) target = $region13
    $region12: #{tpu_custom_call.1} parent=1 // pred_region
      _
    $region13: #{tpu_custom_call.1} parent=1 // pred_fallthru
      _
    // Predicated region
    $region14: #{tpu_custom_call.1} parent=1 // pred_check
      _
    $region15: #{tpu_custom_call.1} parent=1 // pred_check_branch
      %24 = sbr.rel (0) target = $region17
    $region16: #{tpu_custom_call.1} parent=1 // pred_region
      %s26 = ssub.s32 5120, 5120
      %27 = vsyncadd [#allocation3], %s26
      %s28 = sshll.u32 [#allocation2], 4
      %s29 = int_to_ptr.vmem [resolvable:$true] %s28
      %34 = dma.hbm_to_vmem [thread:$0]  %s3, 5120, %s29, [#allocation3], 64, 64, 4
    $region17: #{tpu_custom_call.1} parent=1 // pred_fallthru
      _
    // Predicated region
    $region18: #{tpu_custom_call.1} parent=1 // pred_check
      _
    $region19: #{tpu_custom_call.1} parent=1 // pred_check_branch
      %36 = sbr.rel (0) target = $region21
    $region20: #{tpu_custom_call.1} parent=1 // pred_region
      _
    $region21: #{tpu_custom_call.1} parent=1 // pred_fallthru
      _
    // Predicated region
    $region22: #{tpu_custom_call.1} parent=1 // pred_check
      _
    $region23: #{tpu_custom_call.1} parent=1 // pred_check_branch
      %38 = sbr.rel (0) target = $region25
    $region24: #{tpu_custom_call.1} parent=1 // pred_region
      _
    $region25: #{tpu_custom_call.1} parent=1 // pred_fallthru
      _
    // Predicated region
    $region26: #{tpu_custom_call.1} parent=1 // pred_check
      _
    $region27: #{tpu_custom_call.1} parent=1 // pred_check_branch
      %40 = sbr.rel (0) target = $region29
    $region28: #{tpu_custom_call.1} parent=1 // pred_region
      _
    $region29: #{tpu_custom_call.1} parent=1 // pred_fallthru
      _
    // Predicated region
    $region30: #{tpu_custom_call.1} parent=1 // pred_check
      _
    $region31: #{tpu_custom_call.1} parent=1 // pred_check_branch
      %42 = sbr.rel (0) target = $region33
    $region32: #{tpu_custom_call.1} parent=1 // pred_region
      _
    $region33: #{tpu_custom_call.1} parent=1 // pred_fallthru
      _
    // Predicated region
    $region34: #{tpu_custom_call.1} parent=1 // pred_check
      _
    $region35: #{tpu_custom_call.1} parent=1 // pred_check_branch
      %44 = sbr.rel (0) target = $region37
    $region36: #{tpu_custom_call.1} parent=1 // pred_region
      _
    $region37: #{tpu_custom_call.1} parent=1 // pred_fallthru
      _
    // Predicated region
    $region38: #{tpu_custom_call.1} parent=1 // pred_check
      _
    $region39: #{tpu_custom_call.1} parent=1 // pred_check_branch
      %46 = sbr.rel (0) target = $region41
    $region40: #{tpu_custom_call.1} parent=1 // pred_region
      _
    $region41: #{tpu_custom_call.1} parent=1 // pred_fallthru
      _
    // Predicated region
    $region42: #{tpu_custom_call.1} parent=1 // pred_check
      _
    $region43: #{tpu_custom_call.1} parent=1 // pred_check_branch
      %48 = sbr.rel (0) target = $region45
    $region44: #{tpu_custom_call.1} parent=1 // pred_region
      %49 = dma.done [#allocation3], 5120
    $region45: #{tpu_custom_call.1} parent=1 // pred_fallthru
      _
    %v51 = vld [vmem:[%s0] sm:$0xf]
    %v52 = vld [vmem:[%s0 + $0x4] sm:$0xf]
    %v53 = vld [vmem:[%s1] sm:$0xf]
    %v54 = vld [vmem:[%s1 + $0x4] sm:$0xf]
    %v55 = vld [vmem:[%s1 + $0x8] sm:$0xf]
    %v56 = vld [vmem:[%s1 + $0xc] sm:$0xf]
    %v57 = vld [vmem:[%s2] sm:$0x1]
    %v59 = vlaneseq
    %v60 = vshrl.u32 %v59, 7
    %v61 = vsub.s32 0, %v60
    %v62 = vrot.slane %v57, %v61
    %v66 = vunpack.c.l.b16 %v51
    %v67 = vunpack.c.l.b16 %v52
    %v68 = vpack.c.b16 %v67, %v66
    %v73 = vunpack.c.l.b16 %v53
    %v74 = vunpack.c.l.b16 %v54
    %v75 = vunpack.c.l.b16 %v55
    %v76 = vunpack.c.l.b16 %v56
    %v77 = vpack.c.b16 %v74, %v73
    %v78 = vpack.c.b16 %v76, %v75
    %vm81 = vcmask 261120
    %v83 = vsel %vm81, %v68, 0
    %85 = vmatprep.subr.bf16.mxu0 0
    %86 = vmatpush1.bf16.msra.mxu0 %v77
    %87 = vmatprep.subr.bf16.mxu0 0
    %88 = vmatpush1.bf16.msra.mxu0 %v78
    %89 = vmatprep.subr.bf16.mxu0 0
    %90 = vmatpush1.bf16.msra.mxu0 0
    %91 = vmatprep.subr.bf16.mxu0 0
    %92 = vmatpush1.bf16.msra.mxu0 0
    %93 = vmatprep.subr.bf16.mxu0 0
    %94 = vmatpush1.bf16.msra.mxu0 0
    %95 = vmatprep.subr.bf16.mxu0 0
    %96 = vmatpush1.bf16.msra.mxu0 0
    %97 = vmatprep.subr.bf16.mxu0 0
    %98 = vmatpush1.bf16.msra.mxu0 0
    %99 = vmatprep.subr.bf16.mxu0 0
    %100 = vmatpush1.bf16.msra.mxu0 0
    %101 = vmatprep.subr.bf16.mxu0 0
    %102 = vmatpush1.bf16.msra.mxu0 0
    %103 = vmatprep.subr.bf16.mxu0 0
    %104 = vmatpush1.bf16.msra.mxu0 0
    %105 = vmatprep.subr.bf16.mxu0 0
    %106 = vmatpush1.bf16.msra.mxu0 0
    %107 = vmatprep.subr.bf16.mxu0 0
    %108 = vmatpush1.bf16.msra.mxu0 0
    %109 = vmatprep.subr.bf16.mxu0 0
    %110 = vmatpush1.bf16.msra.mxu0 0
    %111 = vmatprep.subr.bf16.mxu0 0
    %112 = vmatpush1.bf16.msra.mxu0 0
    %113 = vmatprep.subr.bf16.mxu0 0
    %114 = vmatpush1.bf16.msra.mxu0 0
    %115 = vmatprep.subr.bf16.mxu0 0
    %116 = vmatpush1.bf16.msra.mxu0 0
    %117 = vmatprep.mubr.bf16.mxu0 0
    %118 = vmatmul.mubr.bf16.gmra.mrb[0].mxu0 %v83
    %v119 = vpop.f32.mrb[0].mxu0
    %v120 = vadd.f32 %v62, %v119
    %v121 = vpop.f32.mrb[0].mxu0
    %v122 = vpop.f32.mrb[0].mxu0
    %v123 = vadd.f32 %v62, %v122
    %v124 = vpop.f32.mrb[0].mxu0
    %125 = vdwg.mxu0
    %v126 = vmax.f32 %v120, 0.0
    %v127 = vmax.f32 %v123, 0.0
    %v128 = vpack.c.bf16 %v127, %v126
    %v129 = vld [vmem:[#allocation2] sm:$0xf]
    %v130 = vld [vmem:[#allocation2 + $0x4] sm:$0xf]
    %v131 = vld [vmem:[#allocation2 + $0x8] sm:$0xf]
    %v132 = vld [vmem:[#allocation2 + $0xc] sm:$0xf]
    %v133 = vld [vmem:[#allocation2 + $0x10] sm:$0xf]
    %v134 = vld [vmem:[#allocation2 + $0x14] sm:$0xf]
    %v135 = vld [vmem:[#allocation2 + $0x18] sm:$0xf]
    %v136 = vld [vmem:[#allocation2 + $0x1c] sm:$0xf]
    %v137 = vld [vmem:[#allocation2 + $0x20] sm:$0xf]
    %v138 = vld [vmem:[#allocation2 + $0x24] sm:$0xf]
    %v139 = vld [vmem:[#allocation2 + $0x28] sm:$0xf]
    %v140 = vld [vmem:[#allocation2 + $0x2c] sm:$0xf]
    %v141 = vld [vmem:[#allocation2 + $0x30] sm:$0xf]
    %v142 = vld [vmem:[#allocation2 + $0x34] sm:$0xf]
    %v143 = vld [vmem:[#allocation2 + $0x38] sm:$0xf]
    %v144 = vld [vmem:[#allocation2 + $0x3c] sm:$0xf]
    %v145 = vld [vmem:[%s4] sm:$0x1]
    %v147 = vlaneseq
    %v148 = vshrl.u32 %v147, 7
    %v149 = vsub.s32 0, %v148
    %v150 = vrot.slane %v145, %v149
    %v168 = vunpack.c.l.b16 %v129
    %v169 = vunpack.c.l.b16 %v130
    %v170 = vunpack.c.l.b16 %v131
    %v171 = vunpack.c.l.b16 %v132
    %v172 = vunpack.c.l.b16 %v133
    %v173 = vunpack.c.l.b16 %v134
    %v174 = vunpack.c.l.b16 %v135
    %v175 = vunpack.c.l.b16 %v136
    %v176 = vunpack.c.l.b16 %v137
    %v177 = vunpack.c.l.b16 %v138
    %v178 = vunpack.c.l.b16 %v139
    %v179 = vunpack.c.l.b16 %v140
    %v180 = vunpack.c.l.b16 %v141
    %v181 = vunpack.c.l.b16 %v142
    %v182 = vunpack.c.l.b16 %v143
    %v183 = vunpack.c.l.b16 %v144
    %v184 = vpack.c.b16 %v169, %v168
    %v185 = vpack.c.b16 %v171, %v170
    %v186 = vpack.c.b16 %v173, %v172
    %v187 = vpack.c.b16 %v175, %v174
    %v188 = vpack.c.b16 %v177, %v176
    %v189 = vpack.c.b16 %v179, %v178
    %v190 = vpack.c.b16 %v181, %v180
    %v191 = vpack.c.b16 %v183, %v182
    %200 = vmatprep.subr.bf16.mxu0 0
    %201 = vmatpush1.bf16.msra.mxu0 %v184
    %202 = vmatprep.subr.bf16.mxu0 0
    %203 = vmatpush1.bf16.msra.mxu0 %v185
    %204 = vmatprep.subr.bf16.mxu0 0
    %205 = vmatpush1.bf16.msra.mxu0 %v186
    %206 = vmatprep.subr.bf16.mxu0 0
    %207 = vmatpush1.bf16.msra.mxu0 %v187
    %208 = vmatprep.subr.bf16.mxu0 0
    %209 = vmatpush1.bf16.msra.mxu0 %v188
    %210 = vmatprep.subr.bf16.mxu0 0
    %211 = vmatpush1.bf16.msra.mxu0 %v189
    %212 = vmatprep.subr.bf16.mxu0 0
    %213 = vmatpush1.bf16.msra.mxu0 %v190
    %214 = vmatprep.subr.bf16.mxu0 0
    %215 = vmatpush1.bf16.msra.mxu0 %v191
    %216 = vmatprep.subr.bf16.mxu0 0
    %217 = vmatpush1.bf16.msra.mxu0 0
    %218 = vmatprep.subr.bf16.mxu0 0
    %219 = vmatpush1.bf16.msra.mxu0 0
    %220 = vmatprep.subr.bf16.mxu0 0
    %221 = vmatpush1.bf16.msra.mxu0 0
    %222 = vmatprep.subr.bf16.mxu0 0
    %223 = vmatpush1.bf16.msra.mxu0 0
    %224 = vmatprep.subr.bf16.mxu0 0
    %225 = vmatpush1.bf16.msra.mxu0 0
    %226 = vmatprep.subr.bf16.mxu0 0
    %227 = vmatpush1.bf16.msra.mxu0 0
    %228 = vmatprep.subr.bf16.mxu0 0
    %229 = vmatpush1.bf16.msra.mxu0 0
    %230 = vmatprep.subr.bf16.mxu0 0
    %231 = vmatpush1.bf16.msra.mxu0 0
    %232 = vmatprep.mubr.bf16.mxu0 0
    %233 = vmatmul.mubr.bf16.gmra.mrb[0].mxu0 %v128
    %v234 = vpop.f32.mrb[0].mxu0
    %v235 = vadd.f32 %v150, %v234
    %v236 = vpop.f32.mrb[0].mxu0
    %v237 = vpop.f32.mrb[0].mxu0
    %v238 = vadd.f32 %v150, %v237
    %v239 = vpop.f32.mrb[0].mxu0
    %240 = vdwg.mxu0
    %v241 = vmax.f32 %v235, 0.0
    %v242 = vmax.f32 %v238, 0.0
    %v243 = vpack.c.bf16 %v242, %v241
    %s244 = scalar_lea.vmem [#allocation2], 64
    %v245 = vld [vmem:[%s244] sm:$0xf]
    %v246 = vld [vmem:[%s244 + $0x4] sm:$0xf]
    %v247 = vld [vmem:[%s244 + $0x8] sm:$0xf]
    %v248 = vld [vmem:[%s244 + $0xc] sm:$0xf]
    %v249 = vld [vmem:[%s244 + $0x10] sm:$0xf]
    %v250 = vld [vmem:[%s244 + $0x14] sm:$0xf]
    %v251 = vld [vmem:[%s244 + $0x18] sm:$0xf]
    %v252 = vld [vmem:[%s244 + $0x1c] sm:$0xf]
    %v253 = vld [vmem:[%s244 + $0x20] sm:$0xf]
    %v254 = vld [vmem:[%s244 + $0x24] sm:$0xf]
    %v255 = vld [vmem:[%s244 + $0x28] sm:$0xf]
    %v256 = vld [vmem:[%s244 + $0x2c] sm:$0xf]
    %v257 = vld [vmem:[%s244 + $0x30] sm:$0xf]
    %v258 = vld [vmem:[%s244 + $0x34] sm:$0xf]
    %v259 = vld [vmem:[%s244 + $0x38] sm:$0xf]
    %v260 = vld [vmem:[%s244 + $0x3c] sm:$0xf]
    %s261 = scalar_lea.vmem %s4, 1
    %v262 = vld [vmem:[%s261] sm:$0x1]
    %v264 = vlaneseq
    %v265 = vshrl.u32 %v264, 7
    %v266 = vsub.s32 0, %v265
    %v267 = vrot.slane %v262, %v266
    %v285 = vunpack.c.l.b16 %v245
    %v286 = vunpack.c.l.b16 %v246
    %v287 = vunpack.c.l.b16 %v247
    %v288 = vunpack.c.l.b16 %v248
    %v289 = vunpack.c.l.b16 %v249
    %v290 = vunpack.c.l.b16 %v250
    %v291 = vunpack.c.l.b16 %v251
    %v292 = vunpack.c.l.b16 %v252
    %v293 = vunpack.c.l.b16 %v253
    %v294 = vunpack.c.l.b16 %v254
    %v295 = vunpack.c.l.b16 %v255
    %v296 = vunpack.c.l.b16 %v256
    %v297 = vunpack.c.l.b16 %v257
    %v298 = vunpack.c.l.b16 %v258
    %v299 = vunpack.c.l.b16 %v259
    %v300 = vunpack.c.l.b16 %v260
    %v301 = vpack.c.b16 %v286, %v285
    %v302 = vpack.c.b16 %v288, %v287
    %v303 = vpack.c.b16 %v290, %v289
    %v304 = vpack.c.b16 %v292, %v291
    %v305 = vpack.c.b16 %v294, %v293
    %v306 = vpack.c.b16 %v296, %v295
    %v307 = vpack.c.b16 %v298, %v297
    %v308 = vpack.c.b16 %v300, %v299
    %317 = vmatprep.subr.bf16.mxu0 0
    %318 = vmatpush1.bf16.msra.mxu0 %v301
    %319 = vmatprep.subr.bf16.mxu0 0
    %320 = vmatpush1.bf16.msra.mxu0 %v302
    %321 = vmatprep.subr.bf16.mxu0 0
    %322 = vmatpush1.bf16.msra.mxu0 %v303
    %323 = vmatprep.subr.bf16.mxu0 0
    %324 = vmatpush1.bf16.msra.mxu0 %v304
    %325 = vmatprep.subr.bf16.mxu0 0
    %326 = vmatpush1.bf16.msra.mxu0 %v305
    %327 = vmatprep.subr.bf16.mxu0 0
    %328 = vmatpush1.bf16.msra.mxu0 %v306
    %329 = vmatprep.subr.bf16.mxu0 0
    %330 = vmatpush1.bf16.msra.mxu0 %v307
    %331 = vmatprep.subr.bf16.mxu0 0
    %332 = vmatpush1.bf16.msra.mxu0 %v308
    %333 = vmatprep.subr.bf16.mxu0 0
    %334 = vmatpush1.bf16.msra.mxu0 0
    %335 = vmatprep.subr.bf16.mxu0 0
    %336 = vmatpush1.bf16.msra.mxu0 0
    %337 = vmatprep.subr.bf16.mxu0 0
    %338 = vmatpush1.bf16.msra.mxu0 0
    %339 = vmatprep.subr.bf16.mxu0 0
    %340 = vmatpush1.bf16.msra.mxu0 0
    %341 = vmatprep.subr.bf16.mxu0 0
    %342 = vmatpush1.bf16.msra.mxu0 0
    %343 = vmatprep.subr.bf16.mxu0 0
    %344 = vmatpush1.bf16.msra.mxu0 0
    %345 = vmatprep.subr.bf16.mxu0 0
    %346 = vmatpush1.bf16.msra.mxu0 0
    %347 = vmatprep.subr.bf16.mxu0 0
    %348 = vmatpush1.bf16.msra.mxu0 0
    %349 = vmatprep.mubr.bf16.mxu0 0
    %350 = vmatmul.mubr.bf16.gmra.mrb[0].mxu0 %v243
    %v351 = vpop.f32.mrb[0].mxu0
    %v352 = vadd.f32 %v267, %v351
    %v353 = vpop.f32.mrb[0].mxu0
    %v354 = vpop.f32.mrb[0].mxu0
    %v355 = vadd.f32 %v267, %v354
    %v356 = vpop.f32.mrb[0].mxu0
    %357 = vdwg.mxu0
    %v358 = vmax.f32 %v352, 0.0
    %v359 = vmax.f32 %v355, 0.0
    %v360 = vpack.c.bf16 %v359, %v358
    %s361 = scalar_lea.vmem [#allocation2], 128
    %v362 = vld [vmem:[%s361] sm:$0xf]
    %v363 = vld [vmem:[%s361 + $0x4] sm:$0xf]
    %v364 = vld [vmem:[%s361 + $0x8] sm:$0xf]
    %v365 = vld [vmem:[%s361 + $0xc] sm:$0xf]
    %v366 = vld [vmem:[%s361 + $0x10] sm:$0xf]
    %v367 = vld [vmem:[%s361 + $0x14] sm:$0xf]
    %v368 = vld [vmem:[%s361 + $0x18] sm:$0xf]
    %v369 = vld [vmem:[%s361 + $0x1c] sm:$0xf]
    %v370 = vld [vmem:[%s361 + $0x20] sm:$0xf]
    %v371 = vld [vmem:[%s361 + $0x24] sm:$0xf]
    %v372 = vld [vmem:[%s361 + $0x28] sm:$0xf]
    %v373 = vld [vmem:[%s361 + $0x2c] sm:$0xf]
    %v374 = vld [vmem:[%s361 + $0x30] sm:$0xf]
    %v375 = vld [vmem:[%s361 + $0x34] sm:$0xf]
    %v376 = vld [vmem:[%s361 + $0x38] sm:$0xf]
    %v377 = vld [vmem:[%s361 + $0x3c] sm:$0xf]
    %s378 = scalar_lea.vmem %s4, 2
    %v379 = vld [vmem:[%s378] sm:$0x1]
    %v381 = vlaneseq
    %v382 = vshrl.u32 %v381, 7
    %v383 = vsub.s32 0, %v382
    %v384 = vrot.slane %v379, %v383
    %v402 = vunpack.c.l.b16 %v362
    %v403 = vunpack.c.l.b16 %v363
    %v404 = vunpack.c.l.b16 %v364
    %v405 = vunpack.c.l.b16 %v365
    %v406 = vunpack.c.l.b16 %v366
    %v407 = vunpack.c.l.b16 %v367
    %v408 = vunpack.c.l.b16 %v368
    %v409 = vunpack.c.l.b16 %v369
    %v410 = vunpack.c.l.b16 %v370
    %v411 = vunpack.c.l.b16 %v371
    %v412 = vunpack.c.l.b16 %v372
    %v413 = vunpack.c.l.b16 %v373
    %v414 = vunpack.c.l.b16 %v374
    %v415 = vunpack.c.l.b16 %v375
    %v416 = vunpack.c.l.b16 %v376
    %v417 = vunpack.c.l.b16 %v377
    %v418 = vpack.c.b16 %v403, %v402
    %v419 = vpack.c.b16 %v405, %v404
    %v420 = vpack.c.b16 %v407, %v406
    %v421 = vpack.c.b16 %v409, %v408
    %v422 = vpack.c.b16 %v411, %v410
    %v423 = vpack.c.b16 %v413, %v412
    %v424 = vpack.c.b16 %v415, %v414
    %v425 = vpack.c.b16 %v417, %v416
    %434 = vmatprep.subr.bf16.mxu0 0
    %435 = vmatpush1.bf16.msra.mxu0 %v418
    %436 = vmatprep.subr.bf16.mxu0 0
    %437 = vmatpush1.bf16.msra.mxu0 %v419
    %438 = vmatprep.subr.bf16.mxu0 0
    %439 = vmatpush1.bf16.msra.mxu0 %v420
    %440 = vmatprep.subr.bf16.mxu0 0
    %441 = vmatpush1.bf16.msra.mxu0 %v421
    %442 = vmatprep.subr.bf16.mxu0 0
    %443 = vmatpush1.bf16.msra.mxu0 %v422
    %444 = vmatprep.subr.bf16.mxu0 0
    %445 = vmatpush1.bf16.msra.mxu0 %v423
    %446 = vmatprep.subr.bf16.mxu0 0
    %447 = vmatpush1.bf16.msra.mxu0 %v424
    %448 = vmatprep.subr.bf16.mxu0 0
    %449 = vmatpush1.bf16.msra.mxu0 %v425
    %450 = vmatprep.subr.bf16.mxu0 0
    %451 = vmatpush1.bf16.msra.mxu0 0
    %452 = vmatprep.subr.bf16.mxu0 0
    %453 = vmatpush1.bf16.msra.mxu0 0
    %454 = vmatprep.subr.bf16.mxu0 0
    %455 = vmatpush1.bf16.msra.mxu0 0
    %456 = vmatprep.subr.bf16.mxu0 0
    %457 = vmatpush1.bf16.msra.mxu0 0
    %458 = vmatprep.subr.bf16.mxu0 0
    %459 = vmatpush1.bf16.msra.mxu0 0
    %460 = vmatprep.subr.bf16.mxu0 0
    %461 = vmatpush1.bf16.msra.mxu0 0
    %462 = vmatprep.subr.bf16.mxu0 0
    %463 = vmatpush1.bf16.msra.mxu0 0
    %464 = vmatprep.subr.bf16.mxu0 0
    %465 = vmatpush1.bf16.msra.mxu0 0
    %466 = vmatprep.mubr.bf16.mxu0 0
    %467 = vmatmul.mubr.bf16.gmra.mrb[0].mxu0 %v360
    %v468 = vpop.f32.mrb[0].mxu0
    %v469 = vadd.f32 %v384, %v468
    %v470 = vpop.f32.mrb[0].mxu0
    %v471 = vpop.f32.mrb[0].mxu0
    %v472 = vadd.f32 %v384, %v471
    %v473 = vpop.f32.mrb[0].mxu0
    %474 = vdwg.mxu0
    %v475 = vmax.f32 %v469, 0.0
    %v476 = vmax.f32 %v472, 0.0
    %v477 = vpack.c.bf16 %v476, %v475
    %s478 = scalar_lea.vmem [#allocation2], 192
    %v479 = vld [vmem:[%s478] sm:$0xf]
    %v480 = vld [vmem:[%s478 + $0x4] sm:$0xf]
    %v481 = vld [vmem:[%s478 + $0x8] sm:$0xf]
    %v482 = vld [vmem:[%s478 + $0xc] sm:$0xf]
    %v483 = vld [vmem:[%s478 + $0x10] sm:$0xf]
    %v484 = vld [vmem:[%s478 + $0x14] sm:$0xf]
    %v485 = vld [vmem:[%s478 + $0x18] sm:$0xf]
    %v486 = vld [vmem:[%s478 + $0x1c] sm:$0xf]
    %v487 = vld [vmem:[%s478 + $0x20] sm:$0xf]
    %v488 = vld [vmem:[%s478 + $0x24] sm:$0xf]
    %v489 = vld [vmem:[%s478 + $0x28] sm:$0xf]
    %v490 = vld [vmem:[%s478 + $0x2c] sm:$0xf]
    %v491 = vld [vmem:[%s478 + $0x30] sm:$0xf]
    %v492 = vld [vmem:[%s478 + $0x34] sm:$0xf]
    %v493 = vld [vmem:[%s478 + $0x38] sm:$0xf]
    %v494 = vld [vmem:[%s478 + $0x3c] sm:$0xf]
    %s495 = scalar_lea.vmem %s4, 3
    %v496 = vld [vmem:[%s495] sm:$0x1]
    %v498 = vlaneseq
    %v499 = vshrl.u32 %v498, 7
    %v500 = vsub.s32 0, %v499
    %v501 = vrot.slane %v496, %v500
    %v519 = vunpack.c.l.b16 %v479
    %v520 = vunpack.c.l.b16 %v480
    %v521 = vunpack.c.l.b16 %v481
    %v522 = vunpack.c.l.b16 %v482
    %v523 = vunpack.c.l.b16 %v483
    %v524 = vunpack.c.l.b16 %v484
    %v525 = vunpack.c.l.b16 %v485
    %v526 = vunpack.c.l.b16 %v486
    %v527 = vunpack.c.l.b16 %v487
    %v528 = vunpack.c.l.b16 %v488
    %v529 = vunpack.c.l.b16 %v489
    %v530 = vunpack.c.l.b16 %v490
    %v531 = vunpack.c.l.b16 %v491
    %v532 = vunpack.c.l.b16 %v492
    %v533 = vunpack.c.l.b16 %v493
    %v534 = vunpack.c.l.b16 %v494
    %v535 = vpack.c.b16 %v520, %v519
    %v536 = vpack.c.b16 %v522, %v521
    %v537 = vpack.c.b16 %v524, %v523
    %v538 = vpack.c.b16 %v526, %v525
    %v539 = vpack.c.b16 %v528, %v527
    %v540 = vpack.c.b16 %v530, %v529
    %v541 = vpack.c.b16 %v532, %v531
    %v542 = vpack.c.b16 %v534, %v533
    %551 = vmatprep.subr.bf16.mxu0 0
    %552 = vmatpush1.bf16.msra.mxu0 %v535
    %553 = vmatprep.subr.bf16.mxu0 0
    %554 = vmatpush1.bf16.msra.mxu0 %v536
    %555 = vmatprep.subr.bf16.mxu0 0
    %556 = vmatpush1.bf16.msra.mxu0 %v537
    %557 = vmatprep.subr.bf16.mxu0 0
    %558 = vmatpush1.bf16.msra.mxu0 %v538
    %559 = vmatprep.subr.bf16.mxu0 0
    %560 = vmatpush1.bf16.msra.mxu0 %v539
    %561 = vmatprep.subr.bf16.mxu0 0
    %562 = vmatpush1.bf16.msra.mxu0 %v540
    %563 = vmatprep.subr.bf16.mxu0 0
    %564 = vmatpush1.bf16.msra.mxu0 %v541
    %565 = vmatprep.subr.bf16.mxu0 0
    %566 = vmatpush1.bf16.msra.mxu0 %v542
    %567 = vmatprep.subr.bf16.mxu0 0
    %568 = vmatpush1.bf16.msra.mxu0 0
    %569 = vmatprep.subr.bf16.mxu0 0
    %570 = vmatpush1.bf16.msra.mxu0 0
    %571 = vmatprep.subr.bf16.mxu0 0
    %572 = vmatpush1.bf16.msra.mxu0 0
    %573 = vmatprep.subr.bf16.mxu0 0
    %574 = vmatpush1.bf16.msra.mxu0 0
    %575 = vmatprep.subr.bf16.mxu0 0
    %576 = vmatpush1.bf16.msra.mxu0 0
    %577 = vmatprep.subr.bf16.mxu0 0
    %578 = vmatpush1.bf16.msra.mxu0 0
    %579 = vmatprep.subr.bf16.mxu0 0
    %580 = vmatpush1.bf16.msra.mxu0 0
    %581 = vmatprep.subr.bf16.mxu0 0
    %582 = vmatpush1.bf16.msra.mxu0 0
    %583 = vmatprep.mubr.bf16.mxu0 0
    %584 = vmatmul.mubr.bf16.gmra.mrb[0].mxu0 %v477
    %v585 = vpop.f32.mrb[0].mxu0
    %v586 = vadd.f32 %v501, %v585
    %v587 = vpop.f32.mrb[0].mxu0
    %v588 = vpop.f32.mrb[0].mxu0
    %v589 = vadd.f32 %v501, %v588
    %v590 = vpop.f32.mrb[0].mxu0
    %591 = vdwg.mxu0
    %v592 = vmax.f32 %v586, 0.0
    %v593 = vmax.f32 %v589, 0.0
    %v594 = vpack.c.bf16 %v593, %v592
    %s595 = scalar_lea.vmem [#allocation2], 256
    %v596 = vld [vmem:[%s595] sm:$0xf]
    %v597 = vld [vmem:[%s595 + $0x4] sm:$0xf]
    %v598 = vld [vmem:[%s595 + $0x8] sm:$0xf]
    %v599 = vld [vmem:[%s595 + $0xc] sm:$0xf]
    %v600 = vld [vmem:[%s595 + $0x10] sm:$0xf]
    %v601 = vld [vmem:[%s595 + $0x14] sm:$0xf]
    %v602 = vld [vmem:[%s595 + $0x18] sm:$0xf]
    %v603 = vld [vmem:[%s595 + $0x1c] sm:$0xf]
    %v604 = vld [vmem:[%s595 + $0x20] sm:$0xf]
    %v605 = vld [vmem:[%s595 + $0x24] sm:$0xf]
    %v606 = vld [vmem:[%s595 + $0x28] sm:$0xf]
    %v607 = vld [vmem:[%s595 + $0x2c] sm:$0xf]
    %v608 = vld [vmem:[%s595 + $0x30] sm:$0xf]
    %v609 = vld [vmem:[%s595 + $0x34] sm:$0xf]
    %v610 = vld [vmem:[%s595 + $0x38] sm:$0xf]
    %v611 = vld [vmem:[%s595 + $0x3c] sm:$0xf]
    %s612 = scalar_lea.vmem %s4, 4
    %v613 = vld [vmem:[%s612] sm:$0x1]
    %v615 = vlaneseq
    %v616 = vshrl.u32 %v615, 7
    %v617 = vsub.s32 0, %v616
    %v618 = vrot.slane %v613, %v617
    %v636 = vunpack.c.l.b16 %v596
    %v637 = vunpack.c.l.b16 %v597
    %v638 = vunpack.c.l.b16 %v598
    %v639 = vunpack.c.l.b16 %v599
    %v640 = vunpack.c.l.b16 %v600
    %v641 = vunpack.c.l.b16 %v601
    %v642 = vunpack.c.l.b16 %v602
    %v643 = vunpack.c.l.b16 %v603
    %v644 = vunpack.c.l.b16 %v604
    %v645 = vunpack.c.l.b16 %v605
    %v646 = vunpack.c.l.b16 %v606
    %v647 = vunpack.c.l.b16 %v607
    %v648 = vunpack.c.l.b16 %v608
    %v649 = vunpack.c.l.b16 %v609
    %v650 = vunpack.c.l.b16 %v610
    %v651 = vunpack.c.l.b16 %v611
    %v652 = vpack.c.b16 %v637, %v636
    %v653 = vpack.c.b16 %v639, %v638
    %v654 = vpack.c.b16 %v641, %v640
    %v655 = vpack.c.b16 %v643, %v642
    %v656 = vpack.c.b16 %v645, %v644
    %v657 = vpack.c.b16 %v647, %v646
    %v658 = vpack.c.b16 %v649, %v648
    %v659 = vpack.c.b16 %v651, %v650
    %668 = vmatprep.subr.bf16.mxu0 0
    %669 = vmatpush1.bf16.msra.mxu0 %v652
    %670 = vmatprep.subr.bf16.mxu0 0
    %671 = vmatpush1.bf16.msra.mxu0 %v653
    %672 = vmatprep.subr.bf16.mxu0 0
    %673 = vmatpush1.bf16.msra.mxu0 %v654
    %674 = vmatprep.subr.bf16.mxu0 0
    %675 = vmatpush1.bf16.msra.mxu0 %v655
    %676 = vmatprep.subr.bf16.mxu0 0
    %677 = vmatpush1.bf16.msra.mxu0 %v656
    %678 = vmatprep.subr.bf16.mxu0 0
    %679 = vmatpush1.bf16.msra.mxu0 %v657
    %680 = vmatprep.subr.bf16.mxu0 0
    %681 = vmatpush1.bf16.msra.mxu0 %v658
    %682 = vmatprep.subr.bf16.mxu0 0
    %683 = vmatpush1.bf16.msra.mxu0 %v659
    %684 = vmatprep.subr.bf16.mxu0 0
    %685 = vmatpush1.bf16.msra.mxu0 0
    %686 = vmatprep.subr.bf16.mxu0 0
    %687 = vmatpush1.bf16.msra.mxu0 0
    %688 = vmatprep.subr.bf16.mxu0 0
    %689 = vmatpush1.bf16.msra.mxu0 0
    %690 = vmatprep.subr.bf16.mxu0 0
    %691 = vmatpush1.bf16.msra.mxu0 0
    %692 = vmatprep.subr.bf16.mxu0 0
    %693 = vmatpush1.bf16.msra.mxu0 0
    %694 = vmatprep.subr.bf16.mxu0 0
    %695 = vmatpush1.bf16.msra.mxu0 0
    %696 = vmatprep.subr.bf16.mxu0 0
    %697 = vmatpush1.bf16.msra.mxu0 0
    %698 = vmatprep.subr.bf16.mxu0 0
    %699 = vmatpush1.bf16.msra.mxu0 0
    %700 = vmatprep.mubr.bf16.mxu0 0
    %701 = vmatmul.mubr.bf16.gmra.mrb[0].mxu0 %v594
    %v702 = vpop.f32.mrb[0].mxu0
    %v703 = vadd.f32 %v618, %v702
    %v704 = vpop.f32.mrb[0].mxu0
    %v705 = vpop.f32.mrb[0].mxu0
    %v706 = vadd.f32 %v618, %v705
    %v707 = vpop.f32.mrb[0].mxu0
    %708 = vdwg.mxu0
    %v709 = vmax.f32 %v703, 0.0
    %v710 = vmax.f32 %v706, 0.0
    %v711 = vpack.c.bf16 %v710, %v709
    %v712 = vld [vmem:[%s5] sm:$0xf]
    %v713 = vld [vmem:[%s5 + $0x4] sm:$0xf]
    %v714 = vld [vmem:[%s5 + $0x8] sm:$0xf]
    %v715 = vld [vmem:[%s5 + $0xc] sm:$0xf]
    %v716 = vld [vmem:[%s5 + $0x10] sm:$0xf]
    %v717 = vld [vmem:[%s5 + $0x14] sm:$0xf]
    %v718 = vld [vmem:[%s5 + $0x18] sm:$0xf]
    %v719 = vld [vmem:[%s5 + $0x1c] sm:$0xf]
    %v720 = vld [vmem:[%s5 + $0x20] sm:$0xf]
    %v721 = vld [vmem:[%s5 + $0x24] sm:$0xf]
    %v722 = vld [vmem:[%s5 + $0x28] sm:$0xf]
    %v723 = vld [vmem:[%s5 + $0x2c] sm:$0xf]
    %v724 = vld [vmem:[%s5 + $0x30] sm:$0xf]
    %v725 = vld [vmem:[%s5 + $0x34] sm:$0xf]
    %v726 = vld [vmem:[%s5 + $0x38] sm:$0xf]
    %v727 = vld [vmem:[%s5 + $0x3c] sm:$0xf]
    %v728 = vld [vmem:[%s6] sm:$0x1]
    %v730 = vlaneseq
    %v731 = vshrl.u32 %v730, 7
    %v732 = vsub.s32 0, %v731
    %v733 = vrot.slane %v728, %v732
    %v751 = vunpack.c.l.b16 %v712
    %v752 = vunpack.c.l.b16 %v713
    %v753 = vunpack.c.l.b16 %v714
    %v754 = vunpack.c.l.b16 %v715
    %v755 = vunpack.c.l.b16 %v716
    %v756 = vunpack.c.l.b16 %v717
    %v757 = vunpack.c.l.b16 %v718
    %v758 = vunpack.c.l.b16 %v719
    %v759 = vunpack.c.l.b16 %v720
    %v760 = vunpack.c.l.b16 %v721
    %v761 = vunpack.c.l.b16 %v722
    %v762 = vunpack.c.l.b16 %v723
    %v763 = vunpack.c.l.b16 %v724
    %v764 = vunpack.c.l.b16 %v725
    %v765 = vunpack.c.l.b16 %v726
    %v766 = vunpack.c.l.b16 %v727
    %v767 = vpack.c.b16 %v752, %v751
    %v768 = vpack.c.b16 %v754, %v753
    %v769 = vpack.c.b16 %v756, %v755
    %v770 = vpack.c.b16 %v758, %v757
    %v771 = vpack.c.b16 %v760, %v759
    %v772 = vpack.c.b16 %v762, %v761
    %v773 = vpack.c.b16 %v764, %v763
    %v774 = vpack.c.b16 %v766, %v765
    %783 = vmatprep.subr.bf16.mxu0 0
    %784 = vmatpush1.bf16.msra.mxu0 %v767
    %785 = vmatprep.subr.bf16.mxu0 0
    %786 = vmatpush1.bf16.msra.mxu0 %v768
    %787 = vmatprep.subr.bf16.mxu0 0
    %788 = vmatpush1.bf16.msra.mxu0 %v769
    %789 = vmatprep.subr.bf16.mxu0 0
    %790 = vmatpush1.bf16.msra.mxu0 %v770
    %791 = vmatprep.subr.bf16.mxu0 0
    %792 = vmatpush1.bf16.msra.mxu0 %v771
    %793 = vmatprep.subr.bf16.mxu0 0
    %794 = vmatpush1.bf16.msra.mxu0 %v772
    %795 = vmatprep.subr.bf16.mxu0 0
    %796 = vmatpush1.bf16.msra.mxu0 %v773
    %797 = vmatprep.subr.bf16.mxu0 0
    %798 = vmatpush1.bf16.msra.mxu0 %v774
    %799 = vmatprep.subr.bf16.mxu0 0
    %800 = vmatpush1.bf16.msra.mxu0 0
    %801 = vmatprep.subr.bf16.mxu0 0
    %802 = vmatpush1.bf16.msra.mxu0 0
    %803 = vmatprep.subr.bf16.mxu0 0
    %804 = vmatpush1.bf16.msra.mxu0 0
    %805 = vmatprep.subr.bf16.mxu0 0
    %806 = vmatpush1.bf16.msra.mxu0 0
    %807 = vmatprep.subr.bf16.mxu0 0
    %808 = vmatpush1.bf16.msra.mxu0 0
    %809 = vmatprep.subr.bf16.mxu0 0
    %810 = vmatpush1.bf16.msra.mxu0 0
    %811 = vmatprep.subr.bf16.mxu0 0
    %812 = vmatpush1.bf16.msra.mxu0 0
    %813 = vmatprep.subr.bf16.mxu0 0
    %814 = vmatpush1.bf16.msra.mxu0 0
    %815 = vmatprep.mubr.bf16.mxu0 0
    %816 = vmatmul.mubr.bf16.gmra.mrb[0].mxu0 %v711
    %v817 = vpop.f32.mrb[0].mxu0
    %v818 = vadd.f32 %v733, %v817
    %v819 = vpop.f32.mrb[0].mxu0
    %v820 = vpop.f32.mrb[0].mxu0
    %v821 = vadd.f32 %v733, %v820
    %v822 = vpop.f32.mrb[0].mxu0
    %823 = vdwg.mxu0
    %v824 = vmax.f32 %v818, 0.0
    %v825 = vmax.f32 %v821, 0.0
    %v826 = vpack.c.bf16 %v825, %v824
    %v827 = vld [vmem:[%s7] sm:$0xf]
    %v828 = vld [vmem:[%s7 + $0x4] sm:$0xf]
    %v829 = vld [vmem:[%s7 + $0x8] sm:$0xf]
    %v830 = vld [vmem:[%s7 + $0xc] sm:$0xf]
    %v831 = vld [vmem:[%s8] sm:$0x1]
    %v833 = vlaneseq
    %v834 = vshrl.u32 %v833, 7
    %v835 = vsub.s32 0, %v834
    %v836 = vrot.slane %v831, %v835
    %v842 = vunpack.c.l.b16 %v827
    %v843 = vunpack.c.l.b16 %v828
    %v844 = vunpack.c.l.b16 %v829
    %v845 = vunpack.c.l.b16 %v830
    %v846 = vpack.c.b16 %v843, %v842
    %v847 = vpack.c.b16 %v845, %v844
    %v851 = vsel %vm81, %v826, 0
    %853 = vmatprep.subr.bf16.mxu0 0
    %854 = vmatpush1.bf16.msra.mxu0 %v846
    %855 = vmatprep.subr.bf16.mxu0 0
    %856 = vmatpush1.bf16.msra.mxu0 %v847
    %857 = vmatprep.subr.bf16.mxu0 0
    %858 = vmatpush1.bf16.msra.mxu0 0
    %859 = vmatprep.subr.bf16.mxu0 0
    %860 = vmatpush1.bf16.msra.mxu0 0
    %861 = vmatprep.subr.bf16.mxu0 0
    %862 = vmatpush1.bf16.msra.mxu0 0
    %863 = vmatprep.subr.bf16.mxu0 0
    %864 = vmatpush1.bf16.msra.mxu0 0
    %865 = vmatprep.subr.bf16.mxu0 0
    %866 = vmatpush1.bf16.msra.mxu0 0
    %867 = vmatprep.subr.bf16.mxu0 0
    %868 = vmatpush1.bf16.msra.mxu0 0
    %869 = vmatprep.subr.bf16.mxu0 0
    %870 = vmatpush1.bf16.msra.mxu0 0
    %871 = vmatprep.subr.bf16.mxu0 0
    %872 = vmatpush1.bf16.msra.mxu0 0
    %873 = vmatprep.subr.bf16.mxu0 0
    %874 = vmatpush1.bf16.msra.mxu0 0
    %875 = vmatprep.subr.bf16.mxu0 0
    %876 = vmatpush1.bf16.msra.mxu0 0
    %877 = vmatprep.subr.bf16.mxu0 0
    %878 = vmatpush1.bf16.msra.mxu0 0
    %879 = vmatprep.subr.bf16.mxu0 0
    %880 = vmatpush1.bf16.msra.mxu0 0
    %881 = vmatprep.subr.bf16.mxu0 0
    %882 = vmatpush1.bf16.msra.mxu0 0
    %883 = vmatprep.subr.bf16.mxu0 0
    %884 = vmatpush1.bf16.msra.mxu0 0
    %885 = vmatprep.mubr.bf16.mxu0 0
    %886 = vmatmul.mubr.bf16.gmra.mrb[0].mxu0 %v851
    %v887 = vpop.f32.mrb[0].mxu0
    %v888 = vadd.f32 %v836, %v887
    %v889 = vpop.f32.mrb[0].mxu0
    %v890 = vpop.f32.mrb[0].mxu0
    %v891 = vadd.f32 %v836, %v890
    %v892 = vpop.f32.mrb[0].mxu0
    %893 = vdwg.mxu0
    %894 = vmax.xlane.f32.xlu0 %v888
    %v895 = vpop.xlane.xlu0 %894
    %896 = vmax.xlane.f32.xlu0 %v891
    %v897 = vpop.xlane.xlu0 %896
    %v898 = vsub.f32 %v888, %v895
    %v899 = vsub.f32 %v891, %v897
    %v900 = vmul.f32 %v898, 1.442695
    %v901 = vpow.pop %v900
    %v902 = vmul.f32 %v899, 1.442695
    %v903 = vpow.pop %v902
    %904 = vadd.xlane.f32.xlu0 %v901
    %v905 = vpop.xlane.xlu0 %904
    %906 = vadd.xlane.f32.xlu0 %v903
    %v907 = vpop.xlane.xlu0 %906
    %v908 = vlog2.pop %v905
    %v909 = vmul.f32 %v908, 0.6931472
    %v910 = vlog2.pop %v907
    %v911 = vmul.f32 %v910, 0.6931472
    %v912 = vsub.f32 %v898, %v909
    %v913 = vsub.f32 %v899, %v911
    %v914 = vld [vmem:[%s9] sm:$0xff]
    %v915 = vld [vmem:[%s9 + $0x8] sm:$0xff]
    %v916 = vadd.f32 %v888, %v914
    %v917 = vadd.f32 %v891, %v915
    %918 = vmax.xlane.f32.xlu0 %v916
    %v919 = vpop.xlane.xlu0 %918
    %920 = vmax.xlane.f32.xlu0 %v917
    %v921 = vpop.xlane.xlu0 %920
    %v922 = vlaneseq
    %v923 = vand.u32 %v922, 127
    %vm924 = vcmp.ge.f32.partialorder %v916, %v919
    %vm925 = vcmp.ge.f32.partialorder %v917, %v921
    %v926 = vsel %vm924, %v923, 128
    %v927 = vsel %vm925, %v923, 128
    %v928 = vand.u32 %v926, 65535
    %v929 = vshra.s32 %v926, 16
    %v930 = vcvt.s32.f32 %v928
    %v931 = vcvt.s32.f32 %v929
    %932 = vmin.xlane.f32.xlu0 %v931
    %v933 = vpop.xlane.xlu0 %932
    %vm934 = vcmp.eq.f32.partialorder %v931, %v933
    %v935 = vsel %vm934, %v930, inf
    %936 = vmin.xlane.f32.xlu0 %v935
    %v937 = vpop.xlane.xlu0 %936
    %v938 = vcvt.f32.s32 %v937
    %v939 = vcvt.f32.s32 %v933
    %v940 = vshll.u32 %v939, 16
    %v941 = vadd.s32 %v940, %v938
    %v942 = vand.u32 %v927, 65535
    %v943 = vshra.s32 %v927, 16
    %v944 = vcvt.s32.f32 %v942
    %v945 = vcvt.s32.f32 %v943
    %946 = vmin.xlane.f32.xlu0 %v945
    %v947 = vpop.xlane.xlu0 %946
    %vm948 = vcmp.eq.f32.partialorder %v945, %v947
    %v949 = vsel %vm948, %v944, inf
    %950 = vmin.xlane.f32.xlu0 %v949
    %v951 = vpop.xlane.xlu0 %950
    %v952 = vcvt.f32.s32 %v951
    %v953 = vcvt.f32.s32 %v947
    %v954 = vshll.u32 %v953, 16
    %v955 = vadd.s32 %v954, %v952
    %v956 = vcvt.s32.f32 %v941
    %v957 = vcvt.s32.f32 %v955
    %vm958 = vcmp.eq.s32.totalorder %v923, 127
    %v959 = vsel %vm958, %v956, %v912
    %v960 = vsel %vm958, %v957, %v913
    %961 = vst [vmem:[#allocation5] sm:$0xff] %v959
    %962 = vst [vmem:[#allocation5 + $0x8] sm:$0xff] %v960
    // Predicated region
    $region46: #{tpu_custom_call.1} parent=1 // pred_check
      _
    $region47: #{tpu_custom_call.1} parent=1 // pred_check_branch
      %964 = sbr.rel (0) target = $region49
    $region48: #{tpu_custom_call.1} parent=1 // pred_region
      %s966 = ssub.s32 256, 256
      %967 = vsyncadd [#allocation4], %s966
      %s968 = sshll.u32 [#allocation5], 4
      %s969 = int_to_ptr.vmem [resolvable:$true] %s968
      %974 = dma.vmem_to_hbm [thread:$0]  %s969, 256, %s10, [#allocation4], 128, 128, 8
    $region49: #{tpu_custom_call.1} parent=1 // pred_fallthru
      _
    // Predicated region
    $region50: #{tpu_custom_call.1} parent=1 // pred_check
      _
    $region51: #{tpu_custom_call.1} parent=1 // pred_check_branch
      %976 = sbr.rel (0) target = $region53
    $region52: #{tpu_custom_call.1} parent=1 // pred_region
      %977 = dma.done [#allocation4], 256
    $region53: #{tpu_custom_call.1} parent=1 // pred_fallthru
      _
    %978 = vsyncpa [#allocation3], 1
    %979 = vsyncpa [#allocation4], 1

</llo_original>
